<compile_context>
chip_gen: v7x
topology: tpu7x:2x2x1
jax: 0.10.0
libtpu: 0.0.40
codegen_flags: <defaults>
</compile_context>

<pallas_src>
import functools

import jax
import jax.numpy as jnp
from jax.experimental import pallas as pl
from jax.experimental.pallas import tpu as pltpu


def qfunc_kernel(obs_ref, act_ref, w1o_ref, w1a_ref, b1_ref,
                 w2_ref, b2_ref, w3_ref, b3_ref, out_ref):
    """Fused 3-layer MLP tile: (Linear+ReLU) x2 -> Linear(out=1), lane-dense output."""
    cd = w1o_ref.dtype  # MXU operand dtype (f32, or bf16 on v6e/v7x)

    # Layer 1: concat(obs, act) @ w1 expressed as two matmuls (no HBM concat needed).
    h1 = (jnp.dot(obs_ref[...].astype(cd), w1o_ref[...],
                  preferred_element_type=jnp.float32)
          + jnp.dot(act_ref[...].astype(cd), w1a_ref[...],
                    preferred_element_type=jnp.float32)
          + b1_ref[...])
    h1 = jnp.maximum(h1, 0.0)                          # ReLU in f32 (VPU-safe on v5e)

    # Layer 2.
    h2 = jnp.dot(h1.astype(cd), w2_ref[...],
                 preferred_element_type=jnp.float32) + b2_ref[...]
    h2 = jnp.maximum(h2, 0.0)

    # Layer 3 (H2 -> 1) on the VPU/XLU: row-broadcast multiply + lane reduce.
    # Result is written as a lane-dense (1, block_b) row, not a masked (block_b, 1) column.
    qv = jnp.sum(h2 * w3_ref[...], axis=-1) + b3_ref[0]     # (block_b,)
    out_ref[...] = qv[None, :].astype(out_ref.dtype)        # (1, block_b)


@functools.partial(jax.jit, static_argnames=("block_b", "compute_dtype"))
def mlp_qfunction(obs, act, params, block_b=1024, compute_dtype=None):
    """Pallas forward for MLPQFunction. Returns shape (B,).

    block_b: batch tile. Large tiles amortize per-grid-step overhead; on v7x prefer
             a block_b that yields >= 2 grid steps so both TensorCores are used.
    compute_dtype: dtype of the MXU operands for the first two layers
             (jnp.bfloat16 recommended on v6e/v7x, None/f32 on v5e).
    """
    w1, b1, w2, b2, w3, b3 = params
    B, obs_dim = obs.shape
    act_dim = act.shape[1]
    H1 = w1.shape[1]
    H2 = w2.shape[1]

    cd = jnp.dtype(compute_dtype) if compute_dtype is not None else obs.dtype

    # Static split of the first-layer weight (replaces the activation concat).
    w1_obs = w1[:obs_dim].astype(cd)          # (obs_dim, H1)
    w1_act = w1[obs_dim:].astype(cd)          # (act_dim, H1)
    w2c = w2.astype(cd)                       # (H1, H2)
    b1r = b1.reshape(1, H1).astype(jnp.float32)
    b2r = b2.reshape(1, H2).astype(jnp.float32)
    w3r = w3.reshape(1, H2).astype(jnp.float32)   # final layer stays f32 on the VPU
    b3s = b3.reshape(1).astype(jnp.float32)       # scalar bias -> SMEM

    # Choose batch tile; pad ragged batches up to a tile multiple.
    if B <= block_b:
        bb = B                                # single tile, grid=(1,)
        Bp = B
    else:
        assert block_b % 128 == 0, "block_b must be a multiple of 128 when tiling"
        bb = block_b
        Bp = ((B + bb - 1) // bb) * bb
    if Bp != B:
        pad = Bp - B
        obs = jnp.pad(obs, ((0, pad), (0, 0)))
        act = jnp.pad(act, ((0, pad), (0, 0)))

    grid = (Bp // bb,)

    cost = pl.CostEstimate(
        flops=2 * B * (obs_dim * H1 + act_dim * H1 + H1 * H2 + H2),
        transcendentals=0,
        bytes_accessed=int(obs.size) * obs.dtype.itemsize
        + int(act.size) * act.dtype.itemsize
        + 4 * B
        + sum(int(p.size) * 4 for p in (w1, b1, w2, b2, w3, b3)),
    )

    q_row = pl.pallas_call(
        qfunc_kernel,
        out_shape=jax.ShapeDtypeStruct((1, Bp), jnp.float32),
        grid=grid,
        in_specs=[
            # batch-tiled activations (features on the lane axis)
            pl.BlockSpec((bb, obs_dim), lambda i: (i, 0)),
            pl.BlockSpec((bb, act_dim), lambda i: (i, 0)),
            # weights / biases: full arrays, resident across the grid
            pl.BlockSpec((obs_dim, H1), lambda i: (0, 0)),
            pl.BlockSpec((act_dim, H1), lambda i: (0, 0)),
            pl.BlockSpec((1, H1), lambda i: (0, 0)),
            pl.BlockSpec((H1, H2), lambda i: (0, 0)),
            pl.BlockSpec((1, H2), lambda i: (0, 0)),
            pl.BlockSpec((1, H2), lambda i: (0, 0)),
            # scalar bias of the final layer in SMEM (no padded VMEM tile)
            pl.BlockSpec(memory_space=pltpu.MemorySpace.SMEM),
        ],
        # lane-dense output row: last block dim is bb (>=128 when tiled)
        out_specs=pl.BlockSpec((1, bb), lambda i: (0, i)),
        compiler_params=pltpu.CompilerParams(dimension_semantics=("parallel",)),
        cost_estimate=cost,
    )(obs, act, w1_obs, w1_act, b1r, w2c, b2r, w3r, b3s)

    return q_row[0, :B]                        # (B,)


def init_params(key, obs_dim, act_dim, hidden_sizes):
    """Deterministic synthetic init. Weights stored as (in, out)."""
    sizes = [obs_dim + act_dim] + list(hidden_sizes) + [1]
    params = []
    for j in range(len(sizes) - 1):
        key, kw, kb = jax.random.split(key, 3)
        fan_in = sizes[j]
        bound = 1.0 / jnp.sqrt(fan_in)
        w = jax.random.uniform(kw, (sizes[j], sizes[j + 1]),
                               minval=-bound, maxval=bound, dtype=jnp.float32)
        b = jax.random.uniform(kb, (1, sizes[j + 1]),
                               minval=-bound, maxval=bound, dtype=jnp.float32)
        params += [w, b]
    return tuple(params)


def reference_forward(obs, act, params):
    """Pure-JAX reference matching the PyTorch module."""
    w1, b1, w2, b2, w3, b3 = params
    x = jnp.concatenate([obs, act], axis=-1)
    h = jnp.maximum(x @ w1 + b1, 0.0)
    h = jnp.maximum(h @ w2 + b2, 0.0)
    return jnp.squeeze(h @ w3 + b3, -1)


if __name__ == "__main__":
    obs_dim, act_dim = 11, 3
    hidden_sizes = (32, 32)

    key = jax.random.PRNGKey(0)
    k_obs, k_act, k_params = jax.random.split(key, 3)
    params = init_params(k_params, obs_dim, act_dim, hidden_sizes)

    # --- Case 1: small batch, f32, single tile (grid=(1,)), tight check ---
    B = 16
    obs = jax.random.normal(k_obs, (B, obs_dim), dtype=jnp.float32)
    act = jax.random.normal(k_act, (B, act_dim), dtype=jnp.float32)
    q_pallas = mlp_qfunction(obs, act, params)
    jax.block_until_ready(q_pallas)
    q_ref = reference_forward(obs, act, params)
    assert q_pallas.shape == (B,)
    assert jnp.allclose(q_pallas, q_ref, atol=1e-5, rtol=1e-5), \
        f"f32 mismatch: {jnp.max(jnp.abs(q_pallas - q_ref))}"

    # --- Case 2: ragged batch, multi-step grid with padding, f32 ---
    B2 = 300
    k2o, k2a = jax.random.split(jax.random.PRNGKey(1))
    obs2 = jax.random.normal(k2o, (B2, obs_dim), dtype=jnp.float32)
    act2 = jax.random.normal(k2a, (B2, act_dim), dtype=jnp.float32)
    q2 = mlp_qfunction(obs2, act2, params, block_b=128)
    jax.block_until_ready(q2)
    q2_ref = reference_forward(obs2, act2, params)
    assert q2.shape == (B2,)
    assert jnp.allclose(q2, q2_ref, atol=1e-5, rtol=1e-5), \
        f"padded/grid mismatch: {jnp.max(jnp.abs(q2 - q2_ref))}"

    # --- Case 3: bf16 MXU operands (v6e/v7x optimization), loose check ---
    q3 = mlp_qfunction(obs2, act2, params, block_b=128, compute_dtype=jnp.bfloat16)
    jax.block_until_ready(q3)
    assert jnp.allclose(q3, q2_ref, atol=1e-1, rtol=1e-1), \
        f"bf16 mismatch: {jnp.max(jnp.abs(q3 - q2_ref))}"

    print("KERNEL_OK")
</pallas_src>

<mosaic_0001>
module attributes {stable_mosaic.version = 11 : i64} {
  func.func @qfunc_kernel(%arg0: i32, %arg1: memref<16x11xf32, #tpu.memory_space<vmem>>, %arg2: memref<16x3xf32, #tpu.memory_space<vmem>>, %arg3: memref<11x32xf32, #tpu.memory_space<vmem>>, %arg4: memref<3x32xf32, #tpu.memory_space<vmem>>, %arg5: memref<1x32xf32, #tpu.memory_space<vmem>>, %arg6: memref<32x32xf32, #tpu.memory_space<vmem>>, %arg7: memref<1x32xf32, #tpu.memory_space<vmem>>, %arg8: memref<1x32xf32, #tpu.memory_space<vmem>>, %arg9: memref<1xf32, #tpu.memory_space<smem>>, %arg10: memref<1x16xf32, #tpu.memory_space<vmem>>) attributes {dimension_semantics = [#tpu.dimension_semantics<parallel>], iteration_bounds = array<i64: 1>, scalar_prefetch = 0 : i64, scratch_operands = 0 : i64, tpu.core_type = #tpu.core_type<tc>, window_params = [{transform_indices = @transform_0, window_bounds = array<i64: 16, 11>}, {transform_indices = @transform_1, window_bounds = array<i64: 16, 3>}, {pipeline_mode = #tpu.pipeline_mode<synchronous>, transform_indices = @transform_2, window_bounds = array<i64: 11, 32>}, {pipeline_mode = #tpu.pipeline_mode<synchronous>, transform_indices = @transform_3, window_bounds = array<i64: 3, 32>}, {pipeline_mode = #tpu.pipeline_mode<synchronous>, transform_indices = @transform_4, window_bounds = array<i64: 1, 32>}, {pipeline_mode = #tpu.pipeline_mode<synchronous>, transform_indices = @transform_5, window_bounds = array<i64: 32, 32>}, {pipeline_mode = #tpu.pipeline_mode<synchronous>, transform_indices = @transform_6, window_bounds = array<i64: 1, 32>}, {pipeline_mode = #tpu.pipeline_mode<synchronous>, transform_indices = @transform_7, window_bounds = array<i64: 1, 32>}, {transform_indices = @transform_8, window_bounds = array<i64: 1>}, {transform_indices = @transform_9, window_bounds = array<i64: 1, 16>}]} {
    %c0 = arith.constant 0 : index
    %c0_0 = arith.constant 0 : index
    %0 = vector.load %arg1[%c0, %c0_0] : memref<16x11xf32, #tpu.memory_space<vmem>>, vector<16x11xf32>
    %c0_1 = arith.constant 0 : index
    %c0_2 = arith.constant 0 : index
    %1 = vector.load %arg3[%c0_1, %c0_2] : memref<11x32xf32, #tpu.memory_space<vmem>>, vector<11x32xf32>
    %cst = arith.constant dense<0.000000e+00> : vector<16x32xf32>
    %2 = tpu.matmul %0, %1, %cst {dimension_numbers = #tpu.dot_dimension_numbers<[1], [0], [0], [1], [0, 0, 1, 1], [], []>} : vector<16x11xf32>, vector<11x32xf32>, vector<16x32xf32> -> vector<16x32xf32>
    %c0_3 = arith.constant 0 : index
    %c0_4 = arith.constant 0 : index
    %3 = vector.load %arg2[%c0_3, %c0_4] : memref<16x3xf32, #tpu.memory_space<vmem>>, vector<16x3xf32>
    %c0_5 = arith.constant 0 : index
    %c0_6 = arith.constant 0 : index
    %4 = vector.load %arg4[%c0_5, %c0_6] : memref<3x32xf32, #tpu.memory_space<vmem>>, vector<3x32xf32>
    %cst_7 = arith.constant dense<0.000000e+00> : vector<16x32xf32>
    %5 = tpu.matmul %3, %4, %cst_7 {dimension_numbers = #tpu.dot_dimension_numbers<[1], [0], [0], [1], [0, 0, 1, 1], [], []>} : vector<16x3xf32>, vector<3x32xf32>, vector<16x32xf32> -> vector<16x32xf32>
    %6 = arith.addf %2, %5 : vector<16x32xf32>
    %c0_8 = arith.constant 0 : index
    %c0_9 = arith.constant 0 : index
    %7 = vector.load %arg5[%c0_8, %c0_9] : memref<1x32xf32, #tpu.memory_space<vmem>>, vector<1x32xf32>
    %8 = vector.broadcast %7 : vector<1x32xf32> to vector<16x32xf32>
    %9 = arith.addf %6, %8 : vector<16x32xf32>
    %cst_10 = arith.constant 0.000000e+00 : f32
    %10 = vector.broadcast %cst_10 : f32 to vector<16x32xf32>
    %11 = arith.maximumf %9, %10 : vector<16x32xf32>
    %c0_11 = arith.constant 0 : index
    %c0_12 = arith.constant 0 : index
    %12 = vector.load %arg6[%c0_11, %c0_12] : memref<32x32xf32, #tpu.memory_space<vmem>>, vector<32x32xf32>
    %cst_13 = arith.constant dense<0.000000e+00> : vector<16x32xf32>
    %13 = tpu.matmul %11, %12, %cst_13 {dimension_numbers = #tpu.dot_dimension_numbers<[1], [0], [0], [1], [0, 0, 1, 1], [], []>} : vector<16x32xf32>, vector<32x32xf32>, vector<16x32xf32> -> vector<16x32xf32>
    %c0_14 = arith.constant 0 : index
    %c0_15 = arith.constant 0 : index
    %14 = vector.load %arg7[%c0_14, %c0_15] : memref<1x32xf32, #tpu.memory_space<vmem>>, vector<1x32xf32>
    %15 = vector.broadcast %14 : vector<1x32xf32> to vector<16x32xf32>
    %16 = arith.addf %13, %15 : vector<16x32xf32>
    %cst_16 = arith.constant 0.000000e+00 : f32
    %17 = vector.broadcast %cst_16 : f32 to vector<16x32xf32>
    %18 = arith.maximumf %16, %17 : vector<16x32xf32>
    %c0_17 = arith.constant 0 : index
    %c0_18 = arith.constant 0 : index
    %19 = vector.load %arg8[%c0_17, %c0_18] : memref<1x32xf32, #tpu.memory_space<vmem>>, vector<1x32xf32>
    %20 = vector.broadcast %19 : vector<1x32xf32> to vector<16x32xf32>
    %21 = arith.mulf %18, %20 : vector<16x32xf32>
    %cst_19 = arith.constant dense<0.000000e+00> : vector<16xf32>
    %22 = vector.multi_reduction <add>, %21, %cst_19 [1] : vector<16x32xf32> to vector<16xf32>
    %c0_20 = arith.constant 0 : index
    %23 = memref.load %arg9[%c0_20] : memref<1xf32, #tpu.memory_space<smem>>
    %24 = vector.broadcast %23 : f32 to vector<16xf32>
    %25 = arith.addf %22, %24 : vector<16xf32>
    %26 = vector.shape_cast %25 : vector<16xf32> to vector<1x16xf32>
    %c0_21 = arith.constant 0 : index
    %c0_22 = arith.constant 0 : index
    %27 = vector.load %arg10[%c0_21, %c0_22] : memref<1x16xf32, #tpu.memory_space<vmem>>, vector<1x16xf32>
    tpu.vector_store %arg10[%c0_21, %c0_22], %26 {strides = array<i32>} : memref<1x16xf32, #tpu.memory_space<vmem>>, vector<1x16xf32>,
    return
  }
  func.func @transform_0(%arg0: i32) -> (i32, i32) {
    %c0_i32 = arith.constant 0 : i32
    %c0_i32_0 = arith.constant 0 : i32
    return %arg0, %c0_i32 : i32, i32
  }
  func.func @transform_1(%arg0: i32) -> (i32, i32) {
    %c0_i32 = arith.constant 0 : i32
    %c0_i32_0 = arith.constant 0 : i32
    return %arg0, %c0_i32 : i32, i32
  }
  func.func @transform_2(%arg0: i32) -> (i32, i32) {
    %c0_i32 = arith.constant 0 : i32
    %c0_i32_0 = arith.constant 0 : i32
    %c0_i32_1 = arith.constant 0 : i32
    return %c0_i32, %c0_i32_0 : i32, i32
  }
  func.func @transform_3(%arg0: i32) -> (i32, i32) {
    %c0_i32 = arith.constant 0 : i32
    %c0_i32_0 = arith.constant 0 : i32
    %c0_i32_1 = arith.constant 0 : i32
    return %c0_i32, %c0_i32_0 : i32, i32
  }
  func.func @transform_4(%arg0: i32) -> (i32, i32) {
    %c0_i32 = arith.constant 0 : i32
    %c0_i32_0 = arith.constant 0 : i32
    %c0_i32_1 = arith.constant 0 : i32
    return %c0_i32, %c0_i32_0 : i32, i32
  }
  func.func @transform_5(%arg0: i32) -> (i32, i32) {
    %c0_i32 = arith.constant 0 : i32
    %c0_i32_0 = arith.constant 0 : i32
    %c0_i32_1 = arith.constant 0 : i32
    return %c0_i32, %c0_i32_0 : i32, i32
  }
  func.func @transform_6(%arg0: i32) -> (i32, i32) {
    %c0_i32 = arith.constant 0 : i32
    %c0_i32_0 = arith.constant 0 : i32
    %c0_i32_1 = arith.constant 0 : i32
    return %c0_i32, %c0_i32_0 : i32, i32
  }
  func.func @transform_7(%arg0: i32) -> (i32, i32) {
    %c0_i32 = arith.constant 0 : i32
    %c0_i32_0 = arith.constant 0 : i32
    %c0_i32_1 = arith.constant 0 : i32
    return %c0_i32, %c0_i32_0 : i32, i32
  }
  func.func @transform_8(%arg0: i32) -> i32 {
    %c0_i32 = arith.constant 0 : i32
    %c0_i32_0 = arith.constant 0 : i32
    return %c0_i32 : i32
  }
  func.func @transform_9(%arg0: i32) -> (i32, i32) {
    %c0_i32 = arith.constant 0 : i32
    %c0_i32_0 = arith.constant 0 : i32
    return %c0_i32, %arg0 : i32, i32
  }
}

</mosaic_0001>

<llo_original>
// kernel: mlp_qfunction.1
$region0: #{mlp_qfunction.1}
  #allocation0 [shape = 'u32[]', space=smem, size = 0x4, offset = 0x4, fixed_abs, tag = 'smem constant byte address 0x4 - core index']
  #allocation1 [shape = 'u32[144,128]{1,0:T(1,128)}', space=vmem, size = 0x12000, scoped, tag = 'internal scratch']
  #allocation2 [shape = 'f32[1]{0:T(128)S(6)}', space=smem, size = 0x200, scoped, tag = 'scoped memory for mlp_qfunction.1']
  %s0 = inlined_call_operand.hbm [shape: f32[16,11], index: 0, kind: input, shape index: {}]
  %s1 = inlined_call_operand.vmem [shape: f32[16,3], index: 1, kind: input, shape index: {}]
  %s2 = inlined_call_operand.vmem [shape: f32[11,32], index: 2, kind: input, shape index: {}]
  %s3 = inlined_call_operand.vmem [shape: f32[3,32], index: 3, kind: input, shape index: {}]
  %s4 = inlined_call_operand.vmem [shape: f32[1,32], index: 4, kind: input, shape index: {}]
  %s5 = inlined_call_operand.vmem [shape: f32[32,32], index: 5, kind: input, shape index: {}]
  %s6 = inlined_call_operand.vmem [shape: f32[1,32], index: 6, kind: input, shape index: {}]
  %s7 = inlined_call_operand.vmem [shape: f32[1,32], index: 7, kind: input, shape index: {}]
  %s8 = inlined_call_operand.<no memory space> [shape: f32[1], index: 8, kind: input, shape index: {}]
  %s9 = inlined_call_operand.hbm [shape: f32[1,16], index: 9, kind: output, shape index: {}]
  %s10 = sld [smem:[#allocation0]]
  $region50: #{mlp_qfunction.1} parent=0
    _
  %s12 = ssub.s32 1, %s10
  %s13 = scalar_select 0, %s12, %s10
  %14 = sst [smem:[#allocation2]] %s8
  $region1: #{mlp_qfunction.1} parent=0
    #allocation3 [shape = 'u8[8192]{0}', space=vmem, size = 0x2000, scoped, tag = 'input window, operand 0, single buffered']
    #allocation4 [shape = 's32[1]{0}', space=sflag, size = 0x4, scoped, tag = 'scoped memory for mlp_qfunction.1']
    #allocation5 [shape = 's32[1]{0}', space=sflag, size = 0x4, scoped, tag = 'scoped memory for mlp_qfunction.1']
    #allocation6 [shape = 'u8[512]{0}', space=vmem, size = 0x400, scoped, tag = 'output window, operand 0, single buffered']
    %15 = vsyncpa [#allocation4], 0
    %16 = vsyncpa [#allocation5], 0
    // Predicated region
    $region2: #{mlp_qfunction.1} parent=1 // pred_check
      _
    $region3: #{mlp_qfunction.1} parent=1 // pred_check_branch
      %18 = sbr.rel (0) target = $region5
    $region4: #{mlp_qfunction.1} parent=1 // pred_region
      %s20 = ssub.s32 256, 256
      %21 = vsyncadd [#allocation4], %s20
      %s22 = sshll.u32 [#allocation3], 4
      %s23 = int_to_ptr.vmem [resolvable:$true] %s22
      %28 = dma.hbm_to_vmem [thread:$0]  %s0, 256, %s23, [#allocation4], 128, 128, 8
    $region5: #{mlp_qfunction.1} parent=1 // pred_fallthru
      _
    // Predicated region
    $region6: #{mlp_qfunction.1} parent=1 // pred_check
      _
    $region7: #{mlp_qfunction.1} parent=1 // pred_check_branch
      %30 = sbr.rel (0) target = $region9
    $region8: #{mlp_qfunction.1} parent=1 // pred_region
      _
    $region9: #{mlp_qfunction.1} parent=1 // pred_fallthru
      _
    // Predicated region
    $region10: #{mlp_qfunction.1} parent=1 // pred_check
      _
    $region11: #{mlp_qfunction.1} parent=1 // pred_check_branch
      %32 = sbr.rel (0) target = $region13
    $region12: #{mlp_qfunction.1} parent=1 // pred_region
      _
    $region13: #{mlp_qfunction.1} parent=1 // pred_fallthru
      _
    // Predicated region
    $region14: #{mlp_qfunction.1} parent=1 // pred_check
      _
    $region15: #{mlp_qfunction.1} parent=1 // pred_check_branch
      %34 = sbr.rel (0) target = $region17
    $region16: #{mlp_qfunction.1} parent=1 // pred_region
      _
    $region17: #{mlp_qfunction.1} parent=1 // pred_fallthru
      _
    // Predicated region
    $region18: #{mlp_qfunction.1} parent=1 // pred_check
      _
    $region19: #{mlp_qfunction.1} parent=1 // pred_check_branch
      %36 = sbr.rel (0) target = $region21
    $region20: #{mlp_qfunction.1} parent=1 // pred_region
      _
    $region21: #{mlp_qfunction.1} parent=1 // pred_fallthru
      _
    // Predicated region
    $region22: #{mlp_qfunction.1} parent=1 // pred_check
      _
    $region23: #{mlp_qfunction.1} parent=1 // pred_check_branch
      %38 = sbr.rel (0) target = $region25
    $region24: #{mlp_qfunction.1} parent=1 // pred_region
      _
    $region25: #{mlp_qfunction.1} parent=1 // pred_fallthru
      _
    // Predicated region
    $region26: #{mlp_qfunction.1} parent=1 // pred_check
      _
    $region27: #{mlp_qfunction.1} parent=1 // pred_check_branch
      %40 = sbr.rel (0) target = $region29
    $region28: #{mlp_qfunction.1} parent=1 // pred_region
      _
    $region29: #{mlp_qfunction.1} parent=1 // pred_fallthru
      _
    // Predicated region
    $region30: #{mlp_qfunction.1} parent=1 // pred_check
      _
    $region31: #{mlp_qfunction.1} parent=1 // pred_check_branch
      %42 = sbr.rel (0) target = $region33
    $region32: #{mlp_qfunction.1} parent=1 // pred_region
      _
    $region33: #{mlp_qfunction.1} parent=1 // pred_fallthru
      _
    // Predicated region
    $region34: #{mlp_qfunction.1} parent=1 // pred_check
      _
    $region35: #{mlp_qfunction.1} parent=1 // pred_check_branch
      %44 = sbr.rel (0) target = $region37
    $region36: #{mlp_qfunction.1} parent=1 // pred_region
      _
    $region37: #{mlp_qfunction.1} parent=1 // pred_fallthru
      _
    // Predicated region
    $region38: #{mlp_qfunction.1} parent=1 // pred_check
      _
    $region39: #{mlp_qfunction.1} parent=1 // pred_check_branch
      %46 = sbr.rel (0) target = $region41
    $region40: #{mlp_qfunction.1} parent=1 // pred_region
      %47 = dma.done [#allocation4], 256
    $region41: #{mlp_qfunction.1} parent=1 // pred_fallthru
      _
    %v48 = vld [vmem:[#allocation3] sm:$0xff]
    %v49 = vld [vmem:[#allocation3 + $0x8] sm:$0xff]
    %v50 = vld [vmem:[%s2] sm:$0xff]
    %v51 = vld [vmem:[%s2 + $0x8] sm:$0x7]
    %v52 = vld [vmem:[%s1] sm:$0xff]
    %v53 = vld [vmem:[%s1 + $0x8] sm:$0xff]
    %v54 = vld [vmem:[%s3] sm:$0x7]
    %vm55 = vcmask 23552
    %v57 = vsel %vm55, %v52, 0
    %v60 = vsel %vm55, %v53, 0
    %vm62 = vcmask 1042432
    %v64 = vsel %vm62, %v54, 0
    %66 = vmatprep.subr.mxu0 0.0
    %67 = vmatpush1.msra.mxu0 %v64
    %68 = vmatprep.subr.mxu0 0.0
    %69 = vmatpush1.msra.mxu0 0.0
    %70 = vmatprep.subr.mxu0 0.0
    %71 = vmatpush1.msra.mxu0 0.0
    %72 = vmatprep.subr.mxu0 0.0
    %73 = vmatpush1.msra.mxu0 0.0
    %74 = vmatprep.subr.mxu0 0.0
    %75 = vmatpush1.msra.mxu0 0.0
    %76 = vmatprep.subr.mxu0 0.0
    %77 = vmatpush1.msra.mxu0 0.0
    %78 = vmatprep.subr.mxu0 0.0
    %79 = vmatpush1.msra.mxu0 0.0
    %80 = vmatprep.subr.mxu0 0.0
    %81 = vmatpush1.msra.mxu0 0.0
    %82 = vmatprep.subr.mxu0 0.0
    %83 = vmatpush1.msra.mxu0 0.0
    %84 = vmatprep.subr.mxu0 0.0
    %85 = vmatpush1.msra.mxu0 0.0
    %86 = vmatprep.subr.mxu0 0.0
    %87 = vmatpush1.msra.mxu0 0.0
    %88 = vmatprep.subr.mxu0 0.0
    %89 = vmatpush1.msra.mxu0 0.0
    %90 = vmatprep.subr.mxu0 0.0
    %91 = vmatpush1.msra.mxu0 0.0
    %92 = vmatprep.subr.mxu0 0.0
    %93 = vmatpush1.msra.mxu0 0.0
    %94 = vmatprep.subr.mxu0 0.0
    %95 = vmatpush1.msra.mxu0 0.0
    %96 = vmatprep.subr.mxu0 0.0
    %97 = vmatpush1.msra.mxu0 0.0
    %98 = vmatprep.subr.mxu0 0.0
    %99 = vmatpush1.msra.mxu0 0.0
    %100 = vmatprep.subr.mxu0 0.0
    %101 = vmatpush1.msra.mxu0 0.0
    %102 = vmatprep.subr.mxu0 0.0
    %103 = vmatpush1.msra.mxu0 0.0
    %104 = vmatprep.subr.mxu0 0.0
    %105 = vmatpush1.msra.mxu0 0.0
    %106 = vmatprep.subr.mxu0 0.0
    %107 = vmatpush1.msra.mxu0 0.0
    %108 = vmatprep.subr.mxu0 0.0
    %109 = vmatpush1.msra.mxu0 0.0
    %110 = vmatprep.subr.mxu0 0.0
    %111 = vmatpush1.msra.mxu0 0.0
    %112 = vmatprep.subr.mxu0 0.0
    %113 = vmatpush1.msra.mxu0 0.0
    %114 = vmatprep.subr.mxu0 0.0
    %115 = vmatpush1.msra.mxu0 0.0
    %116 = vmatprep.subr.mxu0 0.0
    %117 = vmatpush1.msra.mxu0 0.0
    %118 = vmatprep.subr.mxu0 0.0
    %119 = vmatpush1.msra.mxu0 0.0
    %120 = vmatprep.subr.mxu0 0.0
    %121 = vmatpush1.msra.mxu0 0.0
    %122 = vmatprep.subr.mxu0 0.0
    %123 = vmatpush1.msra.mxu0 0.0
    %124 = vmatprep.subr.mxu0 0.0
    %125 = vmatpush1.msra.mxu0 0.0
    %126 = vmatprep.subr.mxu0 0.0
    %127 = vmatpush1.msra.mxu0 0.0
    %128 = vmatprep.subr.mxu0 0.0
    %129 = vmatpush1.msra.mxu0 0.0
    %130 = vmatprep.mubr.f32.mxu0 0.0
    %131 = vmatmul.mubr.f32.gmra.mrb[0].mxu0 %v57
    %v132 = vpop.f32.mrb[0].mxu0
    %v133 = vadd.f32 0.0, %v132
    %v134 = vpop.f32.mrb[0].mxu0
    %135 = vmatprep.mubr.f32.mxu0 0.0
    %136 = vmatmul.mubr.f32.gmra.mrb[0].mxu0 %v60
    %v137 = vpop.f32.mrb[0].mxu0
    %v138 = vadd.f32 0.0, %v137
    %v139 = vpop.f32.mrb[0].mxu0
    %140 = vdwg.mxu0
    %vm141 = vcmask 89088
    %v143 = vsel %vm141, %v48, 0
    %v146 = vsel %vm141, %v49, 0
    %v149 = vsel %vm62, %v51, 0
    %151 = vmatprep.subr.mxu0 0.0
    %152 = vmatpush1.msra.mxu0 %v50
    %153 = vmatprep.subr.mxu0 0.0
    %154 = vmatpush1.msra.mxu0 %v149
    %155 = vmatprep.subr.mxu0 0.0
    %156 = vmatpush1.msra.mxu0 0.0
    %157 = vmatprep.subr.mxu0 0.0
    %158 = vmatpush1.msra.mxu0 0.0
    %159 = vmatprep.subr.mxu0 0.0
    %160 = vmatpush1.msra.mxu0 0.0
    %161 = vmatprep.subr.mxu0 0.0
    %162 = vmatpush1.msra.mxu0 0.0
    %163 = vmatprep.subr.mxu0 0.0
    %164 = vmatpush1.msra.mxu0 0.0
    %165 = vmatprep.subr.mxu0 0.0
    %166 = vmatpush1.msra.mxu0 0.0
    %167 = vmatprep.subr.mxu0 0.0
    %168 = vmatpush1.msra.mxu0 0.0
    %169 = vmatprep.subr.mxu0 0.0
    %170 = vmatpush1.msra.mxu0 0.0
    %171 = vmatprep.subr.mxu0 0.0
    %172 = vmatpush1.msra.mxu0 0.0
    %173 = vmatprep.subr.mxu0 0.0
    %174 = vmatpush1.msra.mxu0 0.0
    %175 = vmatprep.subr.mxu0 0.0
    %176 = vmatpush1.msra.mxu0 0.0
    %177 = vmatprep.subr.mxu0 0.0
    %178 = vmatpush1.msra.mxu0 0.0
    %179 = vmatprep.subr.mxu0 0.0
    %180 = vmatpush1.msra.mxu0 0.0
    %181 = vmatprep.subr.mxu0 0.0
    %182 = vmatpush1.msra.mxu0 0.0
    %183 = vmatprep.subr.mxu0 0.0
    %184 = vmatpush1.msra.mxu0 0.0
    %185 = vmatprep.subr.mxu0 0.0
    %186 = vmatpush1.msra.mxu0 0.0
    %187 = vmatprep.subr.mxu0 0.0
    %188 = vmatpush1.msra.mxu0 0.0
    %189 = vmatprep.subr.mxu0 0.0
    %190 = vmatpush1.msra.mxu0 0.0
    %191 = vmatprep.subr.mxu0 0.0
    %192 = vmatpush1.msra.mxu0 0.0
    %193 = vmatprep.subr.mxu0 0.0
    %194 = vmatpush1.msra.mxu0 0.0
    %195 = vmatprep.subr.mxu0 0.0
    %196 = vmatpush1.msra.mxu0 0.0
    %197 = vmatprep.subr.mxu0 0.0
    %198 = vmatpush1.msra.mxu0 0.0
    %199 = vmatprep.subr.mxu0 0.0
    %200 = vmatpush1.msra.mxu0 0.0
    %201 = vmatprep.subr.mxu0 0.0
    %202 = vmatpush1.msra.mxu0 0.0
    %203 = vmatprep.subr.mxu0 0.0
    %204 = vmatpush1.msra.mxu0 0.0
    %205 = vmatprep.subr.mxu0 0.0
    %206 = vmatpush1.msra.mxu0 0.0
    %207 = vmatprep.subr.mxu0 0.0
    %208 = vmatpush1.msra.mxu0 0.0
    %209 = vmatprep.subr.mxu0 0.0
    %210 = vmatpush1.msra.mxu0 0.0
    %211 = vmatprep.subr.mxu0 0.0
    %212 = vmatpush1.msra.mxu0 0.0
    %213 = vmatprep.subr.mxu0 0.0
    %214 = vmatpush1.msra.mxu0 0.0
    %215 = vmatprep.mubr.f32.mxu0 0.0
    %216 = vmatmul.mubr.f32.gmra.mrb[0].mxu0 %v143
    %v217 = vpop.f32.mrb[0].mxu0
    %v218 = vadd.f32 %v133, %v217
    %v219 = vpop.f32.mrb[0].mxu0
    %220 = vmatprep.mubr.f32.mxu0 0.0
    %221 = vmatmul.mubr.f32.gmra.mrb[0].mxu0 %v146
    %v222 = vpop.f32.mrb[0].mxu0
    %v223 = vadd.f32 %v138, %v222
    %v224 = vpop.f32.mrb[0].mxu0
    %225 = vdwg.mxu0
    %v226 = vld [vmem:[%s4] sm:$0x1]
    %v228 = vlaneseq
    %v229 = vshrl.u32 %v228, 7
    %v230 = vsub.s32 0, %v229
    %v231 = vrot.slane %v226, %v230
    %v233 = vadd.f32 %v218, %v231
    %v234 = vadd.f32 %v223, %v231
    %v235 = vmax.f32 %v233, 0.0
    %v236 = vmax.f32 %v234, 0.0
    %v237 = vld [vmem:[%s5] sm:$0xff]
    %v238 = vld [vmem:[%s5 + $0x8] sm:$0xff]
    %v239 = vld [vmem:[%s5 + $0x10] sm:$0xff]
    %v240 = vld [vmem:[%s5 + $0x18] sm:$0xff]
    %v241 = vld [vmem:[%s6] sm:$0x1]
    %v243 = vlaneseq
    %v244 = vshrl.u32 %v243, 7
    %v245 = vsub.s32 0, %v244
    %v246 = vrot.slane %v241, %v245
    %vm248 = vcmask 261120
    %v250 = vsel %vm248, %v235, 0
    %v253 = vsel %vm248, %v236, 0
    %255 = vmatprep.subr.mxu0 0.0
    %256 = vmatpush1.msra.mxu0 %v237
    %257 = vmatprep.subr.mxu0 0.0
    %258 = vmatpush1.msra.mxu0 %v238
    %259 = vmatprep.subr.mxu0 0.0
    %260 = vmatpush1.msra.mxu0 %v239
    %261 = vmatprep.subr.mxu0 0.0
    %262 = vmatpush1.msra.mxu0 %v240
    %263 = vmatprep.subr.mxu0 0.0
    %264 = vmatpush1.msra.mxu0 0.0
    %265 = vmatprep.subr.mxu0 0.0
    %266 = vmatpush1.msra.mxu0 0.0
    %267 = vmatprep.subr.mxu0 0.0
    %268 = vmatpush1.msra.mxu0 0.0
    %269 = vmatprep.subr.mxu0 0.0
    %270 = vmatpush1.msra.mxu0 0.0
    %271 = vmatprep.subr.mxu0 0.0
    %272 = vmatpush1.msra.mxu0 0.0
    %273 = vmatprep.subr.mxu0 0.0
    %274 = vmatpush1.msra.mxu0 0.0
    %275 = vmatprep.subr.mxu0 0.0
    %276 = vmatpush1.msra.mxu0 0.0
    %277 = vmatprep.subr.mxu0 0.0
    %278 = vmatpush1.msra.mxu0 0.0
    %279 = vmatprep.subr.mxu0 0.0
    %280 = vmatpush1.msra.mxu0 0.0
    %281 = vmatprep.subr.mxu0 0.0
    %282 = vmatpush1.msra.mxu0 0.0
    %283 = vmatprep.subr.mxu0 0.0
    %284 = vmatpush1.msra.mxu0 0.0
    %285 = vmatprep.subr.mxu0 0.0
    %286 = vmatpush1.msra.mxu0 0.0
    %287 = vmatprep.subr.mxu0 0.0
    %288 = vmatpush1.msra.mxu0 0.0
    %289 = vmatprep.subr.mxu0 0.0
    %290 = vmatpush1.msra.mxu0 0.0
    %291 = vmatprep.subr.mxu0 0.0
    %292 = vmatpush1.msra.mxu0 0.0
    %293 = vmatprep.subr.mxu0 0.0
    %294 = vmatpush1.msra.mxu0 0.0
    %295 = vmatprep.subr.mxu0 0.0
    %296 = vmatpush1.msra.mxu0 0.0
    %297 = vmatprep.subr.mxu0 0.0
    %298 = vmatpush1.msra.mxu0 0.0
    %299 = vmatprep.subr.mxu0 0.0
    %300 = vmatpush1.msra.mxu0 0.0
    %301 = vmatprep.subr.mxu0 0.0
    %302 = vmatpush1.msra.mxu0 0.0
    %303 = vmatprep.subr.mxu0 0.0
    %304 = vmatpush1.msra.mxu0 0.0
    %305 = vmatprep.subr.mxu0 0.0
    %306 = vmatpush1.msra.mxu0 0.0
    %307 = vmatprep.subr.mxu0 0.0
    %308 = vmatpush1.msra.mxu0 0.0
    %309 = vmatprep.subr.mxu0 0.0
    %310 = vmatpush1.msra.mxu0 0.0
    %311 = vmatprep.subr.mxu0 0.0
    %312 = vmatpush1.msra.mxu0 0.0
    %313 = vmatprep.subr.mxu0 0.0
    %314 = vmatpush1.msra.mxu0 0.0
    %315 = vmatprep.subr.mxu0 0.0
    %316 = vmatpush1.msra.mxu0 0.0
    %317 = vmatprep.subr.mxu0 0.0
    %318 = vmatpush1.msra.mxu0 0.0
    %319 = vmatprep.mubr.f32.mxu0 0.0
    %320 = vmatmul.mubr.f32.gmra.mrb[0].mxu0 %v250
    %v321 = vpop.f32.mrb[0].mxu0
    %v322 = vadd.f32 %v246, %v321
    %v323 = vpop.f32.mrb[0].mxu0
    %324 = vmatprep.mubr.f32.mxu0 0.0
    %325 = vmatmul.mubr.f32.gmra.mrb[0].mxu0 %v253
    %v326 = vpop.f32.mrb[0].mxu0
    %v327 = vadd.f32 %v246, %v326
    %v328 = vpop.f32.mrb[0].mxu0
    %329 = vdwg.mxu0
    %v330 = vmax.f32 %v322, 0.0
    %v331 = vmax.f32 %v327, 0.0
    %v332 = vld [vmem:[%s7] sm:$0x1]
    %v334 = vlaneseq
    %v335 = vshrl.u32 %v334, 7
    %v336 = vsub.s32 0, %v335
    %v337 = vrot.slane %v332, %v336
    %v339 = vmul.f32 %v330, %v337
    %v340 = vmul.f32 %v331, %v337
    %v341 = vsel %vm248, %v339, 0.0
    %342 = vadd.xlane.f32.xlu0 %v341
    %v343 = vpop.xlane.xlu0 %342
    %v344 = vsel %vm248, %v340, 0.0
    %345 = vadd.xlane.f32.xlu0 %v344
    %v346 = vpop.xlane.xlu0 %345
    %s347 = sld [smem:[#allocation2]]
    %v348 = vstv %s347
    %v349 = vadd.f32 %v343, %v348
    %v350 = vadd.f32 %v346, %v348
    %v353 = vlaneseq
    %v354 = vand.u32 %v353, 127
    %v355 = vlaneseq
    %v356 = vshrl.u32 %v355, 7
    %v357 = vsub.s32 %v354, %v356
    %v358 = vrot.slane %v349, %v357
    %v359 = vadd.s32 %v354, 4294967288
    %v360 = vlaneseq
    %v361 = vshrl.u32 %v360, 7
    %v362 = vsub.s32 %v359, %v361
    %v363 = vrot.slane %v350, %v362
    %vm364 = vcmask 130112
    %v365 = vsel %vm364, %v363, %v358
    %vm367 = vcmask 122880
    %368 = vst.msk [vmem:[#allocation6] sm:$0x1] %vm367, %v365
    // Predicated region
    $region42: #{mlp_qfunction.1} parent=1 // pred_check
      _
    $region43: #{mlp_qfunction.1} parent=1 // pred_check_branch
      %370 = sbr.rel (0) target = $region45
    $region44: #{mlp_qfunction.1} parent=1 // pred_region
      %s372 = ssub.s32 16, 16
      %373 = vsyncadd [#allocation5], %s372
      %s375 = sshll.u32 [#allocation6], 4
      %s376 = int_to_ptr.vmem [resolvable:$true] %s375
      %378 = dma.vmem_to_hbm [thread:$0]  %s376, 16, %s9, [#allocation5]
    $region45: #{mlp_qfunction.1} parent=1 // pred_fallthru
      _
    // Predicated region
    $region46: #{mlp_qfunction.1} parent=1 // pred_check
      _
    $region47: #{mlp_qfunction.1} parent=1 // pred_check_branch
      %380 = sbr.rel (0) target = $region49
    $region48: #{mlp_qfunction.1} parent=1 // pred_region
      %381 = dma.done [#allocation5], 16
    $region49: #{mlp_qfunction.1} parent=1 // pred_fallthru
      _
    %382 = vsyncpa [#allocation4], 1
    %383 = vsyncpa [#allocation5], 1

</llo_original>
